<compile_context>
chip_gen: v5e
topology: v5e:2x2
jax: 0.10.0
libtpu: 0.0.40
codegen_flags: <defaults>
</compile_context>

<pallas_src>
import functools

import jax
import jax.numpy as jnp
from jax.experimental import pallas as pl
from jax.experimental.pallas import tpu as pltpu

_LANE = 128                       # vreg lane width
_SUBLANE = 8                      # f32 vreg sublane depth
_PREFERRED_TILE_B = 512           # ~85% of HBM roofline vs ~63% at 256-wide tiles
_VMEM_BUDGET_BYTES = 44 << 20     # stay well inside v7x's 64 MiB physical VMEM
_VMEM_LIMIT_BYTES = 50 << 20      # scoped limit, passed only when needed
_DEFAULT_SCOPED_VMEM = 16 << 20   # most conservative default (v5e)
_SPLIT_NET_MIN_FLOPS = 1 << 28    # per-net/per-tile MXU work worth its own grid step
_SPLIT_NET_MIN_WBYTES = 2 << 20   # ... or per-net weight DMA worth its own grid step
_BF16_MIN_WIDTH = 256             # cast MXU inputs to bf16 at realistic widths


def _round_up(x, m):
    return (x + m - 1) // m * m


def _fused_qnet_kernel(x_ref, w1_ref, b1_ref, w2_ref, b2_ref, out_ref):
    """One grid step: out[n] = relu(x[n] @ W1[n] + b1[n]) @ W2[n] + b2[n].

    The leading block dim carries `net_blk` stacked networks (1 when the net
    axis lives on the grid, N when the grid is collapsed); it is tiny and
    statically unrolled.  Matmuls accumulate in f32 on the MXU; bias + ReLU
    stays f32 on the VPU (free filler under MXU / DMA slack).
    """
    for n in range(x_ref.shape[0]):
        h = jnp.dot(x_ref[n], w1_ref[n], preferred_element_type=jnp.float32)
        h = jnp.maximum(h + b1_ref[n], 0.0)
        q = jnp.dot(h.astype(w2_ref.dtype), w2_ref[n],
                    preferred_element_type=jnp.float32)
        out_ref[n] = (q + b2_ref[n]).astype(out_ref.dtype)


def _pick_layout(N, B, D, H, Ap, x_itemsize, w_itemsize):
    """Choose (net_blk, tile_b, padded_B, vmem_estimate) from static shapes."""
    Bp = _round_up(max(B, 1), _SUBLANE)

    # Put the net axis on the grid (-> shards across v7x's two TensorCores)
    # only when per-net, per-tile work clearly exceeds the ~0.35 us per-step
    # serial-pipeline overhead on single-TC chips.
    per_net_flops = 2 * min(Bp, _PREFERRED_TILE_B) * (D * H + H * Ap)
    per_net_wbytes = (D * H + H * Ap) * w_itemsize
    split_nets = N > 1 and (per_net_flops >= _SPLIT_NET_MIN_FLOPS
                            or per_net_wbytes >= _SPLIT_NET_MIN_WBYTES)
    net_blk = 1 if split_nets else N

    def vmem_bytes(tile):
        # Weights/biases are resident across batch tiles but still
        # double-buffered by BlockSpec; x and out tiles are double-buffered.
        wb = 2 * net_blk * ((D * H + H * Ap) * w_itemsize + (H + Ap) * 4)
        io = 2 * net_blk * tile * (D * x_itemsize + Ap * 4)
        return wb + io

    tile_b = _round_up(min(Bp, _PREFERRED_TILE_B), _SUBLANE)
    while tile_b > _SUBLANE and vmem_bytes(tile_b) > _VMEM_BUDGET_BYTES:
        tile_b = _round_up(tile_b // 2, _SUBLANE)
    # TODO(synk): if the weights alone exceed the VMEM budget (very large H),
    # add an H-tiling "arbitrary" grid axis with an f32 VMEM accumulator.

    Bp = _round_up(Bp, tile_b)
    return net_blk, tile_b, Bp, vmem_bytes(tile_b)


@functools.partial(jax.jit, static_argnames=("n_actions",))
def qnet_forward_stacked(states, packed, *, n_actions):
    """Fused Q-net forward over N stacked networks.

    states: (N, B, D)
    packed: dict from pack_params(): w1 (N,D,H), b1 (N,1,H) f32,
            w2 (N,H,Ap), b2 (N,1,Ap) f32  (Ap = A padded to a lane multiple)
    returns (N, B, n_actions) f32 Q-values.
    """
    w1, b1, w2, b2 = packed["w1"], packed["b1"], packed["w2"], packed["b2"]
    N, B, D = states.shape
    H = w1.shape[2]
    Ap = w2.shape[2]

    net_blk, tile_b, Bp, vmem_est = _pick_layout(
        N, B, D, H, Ap, w1.dtype.itemsize, w1.dtype.itemsize)

    xs = states.astype(w1.dtype)
    if Bp != B:
        xs = jnp.pad(xs, ((0, 0), (0, Bp - B), (0, 0)))

    grid = (N // net_blk, Bp // tile_b)

    cost = pl.CostEstimate(
        flops=2 * N * Bp * (D * H + H * Ap),
        transcendentals=0,
        bytes_accessed=int(xs.size * xs.dtype.itemsize
                           + w1.size * w1.dtype.itemsize
                           + w2.size * w2.dtype.itemsize
                           + (b1.size + b2.size + N * Bp * Ap) * 4),
    )

    compiler_params = pltpu.CompilerParams(
        dimension_semantics=("parallel", "parallel"),
        vmem_limit_bytes=(_VMEM_LIMIT_BYTES
                          if vmem_est > _DEFAULT_SCOPED_VMEM else None),
    )

    q = pl.pallas_call(
        _fused_qnet_kernel,
        out_shape=jax.ShapeDtypeStruct((N, Bp, Ap), jnp.float32),
        grid=grid,
        in_specs=[
            pl.BlockSpec((net_blk, tile_b, D), lambda n, b: (n, b, 0)),
            pl.BlockSpec((net_blk, D, H), lambda n, b: (n, 0, 0)),
            pl.BlockSpec((net_blk, 1, H), lambda n, b: (n, 0, 0)),
            pl.BlockSpec((net_blk, H, Ap), lambda n, b: (n, 0, 0)),
            pl.BlockSpec((net_blk, 1, Ap), lambda n, b: (n, 0, 0)),
        ],
        out_specs=pl.BlockSpec((net_blk, tile_b, Ap), lambda n, b: (n, b, 0)),
        compiler_params=compiler_params,
        cost_estimate=cost,
    )(xs, w1, b1, w2, b2)

    return q[:, :B, :n_actions]


def init_params(key, d_in, d_hidden, n_actions):
    k1, k2 = jax.random.split(key)
    scale1 = 1.0 / jnp.sqrt(jnp.float32(d_in))
    scale2 = 1.0 / jnp.sqrt(jnp.float32(d_hidden))
    return {
        "w1": jax.random.normal(k1, (d_in, d_hidden), jnp.float32) * scale1,
        "b1": jnp.zeros((1, d_hidden), jnp.float32),
        "w2": jax.random.normal(k2, (d_hidden, n_actions), jnp.float32) * scale2,
        "b2": jnp.zeros((1, n_actions), jnp.float32),
    }


def pack_params(stacked):
    """One-time packing (done at construction, NOT per call):
    pad only the action dim to a lane multiple (zero columns are sliced off in
    the wrapper) and cast the MXU operands to bf16 at realistic widths."""
    N, D, H = stacked["w1"].shape
    A = stacked["w2"].shape[2]
    Ap = _round_up(A, _LANE)
    compute_dtype = (jnp.bfloat16 if max(D, H) >= _BF16_MIN_WIDTH
                     else jnp.float32)
    return {
        "w1": stacked["w1"].astype(compute_dtype),
        "b1": stacked["b1"].astype(jnp.float32),
        "w2": jnp.pad(stacked["w2"],
                      ((0, 0), (0, 0), (0, Ap - A))).astype(compute_dtype),
        "b2": jnp.pad(stacked["b2"],
                      ((0, 0), (0, 0), (0, Ap - A))).astype(jnp.float32),
    }


class IQNetPallas:
    """Concrete Pallas-backed realization of the IQNet interface."""

    def __init__(self, d_in=32, d_hidden=32, n_actions=8):
        key = jax.random.PRNGKey(42)
        k_online, k_target = jax.random.split(key)
        online = init_params(k_online, d_in, d_hidden, n_actions)
        target = init_params(k_target, d_in, d_hidden, n_actions)
        # Stacked [2, ...]: index 0 = online net, index 1 = target net.
        self.params = jax.tree_util.tree_map(
            lambda a, b: jnp.stack([a, b]), online, target)
        self.n_actions = n_actions
        # Padding / dtype casting hoisted out of the per-call hot path.
        self._packed = pack_params(self.params)
        self._packed_single = [
            jax.tree_util.tree_map(lambda x, i=i: x[i:i + 1], self._packed)
            for i in range(2)
        ]

    def forward(self, data):
        return qnet_forward_stacked(
            data["state"][None], self._packed_single[0],
            n_actions=self.n_actions)[0]

    def next_forward(self, data):
        return qnet_forward_stacked(
            data["next_state"][None], self._packed_single[1],
            n_actions=self.n_actions)[0]

    def forward_both(self, data):
        """Online + target Q-values in a single fused pallas_call."""
        states = jnp.stack([data["state"], data["next_state"]])
        q = qnet_forward_stacked(states, self._packed,
                                 n_actions=self.n_actions)
        return q[0], q[1]

    def load_pretrain_embedding(self):
        # TODO(synk): checkpoint-loading hook — no compute, nothing to kernelize.
        pass


if __name__ == "__main__":
    B, D, H, A = 2, 32, 32, 8
    key = jax.random.PRNGKey(0)
    ks, kn = jax.random.split(key)
    data = {
        "state": jax.random.normal(ks, (B, D), jnp.float32),
        "next_state": jax.random.normal(kn, (B, D), jnp.float32),
    }

    net = IQNetPallas(d_in=D, d_hidden=H, n_actions=A)

    # Fused hot path: one pallas_call (single grid step) evaluating both nets.
    q, q_next = net.forward_both(data)
    jax.block_until_ready((q, q_next))

    # Interface paths (one network each).
    q_f = net.forward(data)
    q_nf = net.next_forward(data)
    jax.block_until_ready((q_f, q_nf))

    # Pure-JAX reference check of the fused kernel.
    def ref(x, p):
        h = jnp.maximum(x @ p["w1"] + p["b1"], 0.0)
        return h @ p["w2"] + p["b2"]

    online = jax.tree_util.tree_map(lambda x: x[0], net.params)
    target = jax.tree_util.tree_map(lambda x: x[1], net.params)
    assert jnp.allclose(q, ref(data["state"], online), atol=1e-5, rtol=1e-5)
    assert jnp.allclose(q_next, ref(data["next_state"], target),
                        atol=1e-5, rtol=1e-5)
    assert jnp.allclose(q_f, q, atol=1e-6, rtol=1e-6)
    assert jnp.allclose(q_nf, q_next, atol=1e-6, rtol=1e-6)
    assert q.shape == (B, A) and q.dtype == jnp.float32

    print("KERNEL_OK")
</pallas_src>

<mosaic_0001>
module attributes {stable_mosaic.version = 11 : i64} {
  func.func @_fused_qnet_kernel(%arg0: i32, %arg1: i32, %arg2: memref<2x8x32xf32, #tpu.memory_space<vmem>>, %arg3: memref<2x32x32xf32, #tpu.memory_space<vmem>>, %arg4: memref<2x1x32xf32, #tpu.memory_space<vmem>>, %arg5: memref<2x32x128xf32, #tpu.memory_space<vmem>>, %arg6: memref<2x1x128xf32, #tpu.memory_space<vmem>>, %arg7: memref<2x8x128xf32, #tpu.memory_space<vmem>>) attributes {dimension_semantics = [#tpu.dimension_semantics<parallel>, #tpu.dimension_semantics<parallel>], iteration_bounds = array<i64: 1, 1>, scalar_prefetch = 0 : i64, scratch_operands = 0 : i64, tpu.core_type = #tpu.core_type<tc>, window_params = [{transform_indices = @transform_0, window_bounds = array<i64: 2, 8, 32>}, {transform_indices = @transform_1, window_bounds = array<i64: 2, 32, 32>}, {transform_indices = @transform_2, window_bounds = array<i64: 2, 1, 32>}, {transform_indices = @transform_3, window_bounds = array<i64: 2, 32, 128>}, {transform_indices = @transform_4, window_bounds = array<i64: 2, 1, 128>}, {transform_indices = @transform_5, window_bounds = array<i64: 2, 8, 128>}]} {
    %c0 = arith.constant 0 : index
    %c0_0 = arith.constant 0 : index
    %c0_1 = arith.constant 0 : index
    %0 = vector.load %arg2[%c0, %c0_0, %c0_1] : memref<2x8x32xf32, #tpu.memory_space<vmem>>, vector<1x8x32xf32>
    %1 = vector.shape_cast %0 : vector<1x8x32xf32> to vector<8x32xf32>
    %c0_2 = arith.constant 0 : index
    %c0_3 = arith.constant 0 : index
    %c0_4 = arith.constant 0 : index
    %2 = vector.load %arg3[%c0_2, %c0_3, %c0_4] : memref<2x32x32xf32, #tpu.memory_space<vmem>>, vector<1x32x32xf32>
    %3 = vector.shape_cast %2 : vector<1x32x32xf32> to vector<32x32xf32>
    %cst = arith.constant dense<0.000000e+00> : vector<8x32xf32>
    %4 = tpu.matmul %1, %3, %cst {dimension_numbers = #tpu.dot_dimension_numbers<[1], [0], [0], [1], [0, 0, 1, 1], [], []>} : vector<8x32xf32>, vector<32x32xf32>, vector<8x32xf32> -> vector<8x32xf32>
    %c0_5 = arith.constant 0 : index
    %c0_6 = arith.constant 0 : index
    %c0_7 = arith.constant 0 : index
    %5 = vector.load %arg4[%c0_5, %c0_6, %c0_7] : memref<2x1x32xf32, #tpu.memory_space<vmem>>, vector<1x1x32xf32>
    %6 = vector.shape_cast %5 : vector<1x1x32xf32> to vector<1x32xf32>
    %7 = vector.broadcast %6 : vector<1x32xf32> to vector<8x32xf32>
    %8 = arith.addf %4, %7 : vector<8x32xf32>
    %cst_8 = arith.constant 0.000000e+00 : f32
    %9 = vector.broadcast %cst_8 : f32 to vector<8x32xf32>
    %10 = arith.maximumf %8, %9 : vector<8x32xf32>
    %c0_9 = arith.constant 0 : index
    %c0_10 = arith.constant 0 : index
    %c0_11 = arith.constant 0 : index
    %11 = vector.load %arg5[%c0_9, %c0_10, %c0_11] : memref<2x32x128xf32, #tpu.memory_space<vmem>>, vector<1x32x128xf32>
    %12 = vector.shape_cast %11 : vector<1x32x128xf32> to vector<32x128xf32>
    %cst_12 = arith.constant dense<0.000000e+00> : vector<8x128xf32>
    %13 = tpu.matmul %10, %12, %cst_12 {dimension_numbers = #tpu.dot_dimension_numbers<[1], [0], [0], [1], [0, 0, 1, 1], [], []>} : vector<8x32xf32>, vector<32x128xf32>, vector<8x128xf32> -> vector<8x128xf32>
    %c0_13 = arith.constant 0 : index
    %c0_14 = arith.constant 0 : index
    %c0_15 = arith.constant 0 : index
    %14 = vector.load %arg6[%c0_13, %c0_14, %c0_15] : memref<2x1x128xf32, #tpu.memory_space<vmem>>, vector<1x1x128xf32>
    %15 = vector.shape_cast %14 : vector<1x1x128xf32> to vector<1x128xf32>
    %16 = vector.broadcast %15 : vector<1x128xf32> to vector<8x128xf32>
    %17 = arith.addf %13, %16 : vector<8x128xf32>
    %c0_16 = arith.constant 0 : index
    %c0_17 = arith.constant 0 : index
    %c0_18 = arith.constant 0 : index
    %18 = vector.load %arg7[%c0_16, %c0_17, %c0_18] : memref<2x8x128xf32, #tpu.memory_space<vmem>>, vector<1x8x128xf32>
    %19 = vector.shape_cast %18 : vector<1x8x128xf32> to vector<8x128xf32>
    %20 = vector.shape_cast %17 : vector<8x128xf32> to vector<1x8x128xf32>
    tpu.vector_store %arg7[%c0_16, %c0_17, %c0_18], %20 {strides = array<i32>} : memref<2x8x128xf32, #tpu.memory_space<vmem>>, vector<1x8x128xf32>,
    %c1 = arith.constant 1 : index
    %c0_19 = arith.constant 0 : index
    %c0_20 = arith.constant 0 : index
    %21 = vector.load %arg2[%c1, %c0_19, %c0_20] : memref<2x8x32xf32, #tpu.memory_space<vmem>>, vector<1x8x32xf32>
    %22 = vector.shape_cast %21 : vector<1x8x32xf32> to vector<8x32xf32>
    %c1_21 = arith.constant 1 : index
    %c0_22 = arith.constant 0 : index
    %c0_23 = arith.constant 0 : index
    %23 = vector.load %arg3[%c1_21, %c0_22, %c0_23] : memref<2x32x32xf32, #tpu.memory_space<vmem>>, vector<1x32x32xf32>
    %24 = vector.shape_cast %23 : vector<1x32x32xf32> to vector<32x32xf32>
    %cst_24 = arith.constant dense<0.000000e+00> : vector<8x32xf32>
    %25 = tpu.matmul %22, %24, %cst_24 {dimension_numbers = #tpu.dot_dimension_numbers<[1], [0], [0], [1], [0, 0, 1, 1], [], []>} : vector<8x32xf32>, vector<32x32xf32>, vector<8x32xf32> -> vector<8x32xf32>
    %c1_25 = arith.constant 1 : index
    %c0_26 = arith.constant 0 : index
    %c0_27 = arith.constant 0 : index
    %26 = vector.load %arg4[%c1_25, %c0_26, %c0_27] : memref<2x1x32xf32, #tpu.memory_space<vmem>>, vector<1x1x32xf32>
    %27 = vector.shape_cast %26 : vector<1x1x32xf32> to vector<1x32xf32>
    %28 = vector.broadcast %27 : vector<1x32xf32> to vector<8x32xf32>
    %29 = arith.addf %25, %28 : vector<8x32xf32>
    %cst_28 = arith.constant 0.000000e+00 : f32
    %30 = vector.broadcast %cst_28 : f32 to vector<8x32xf32>
    %31 = arith.maximumf %29, %30 : vector<8x32xf32>
    %c1_29 = arith.constant 1 : index
    %c0_30 = arith.constant 0 : index
    %c0_31 = arith.constant 0 : index
    %32 = vector.load %arg5[%c1_29, %c0_30, %c0_31] : memref<2x32x128xf32, #tpu.memory_space<vmem>>, vector<1x32x128xf32>
    %33 = vector.shape_cast %32 : vector<1x32x128xf32> to vector<32x128xf32>
    %cst_32 = arith.constant dense<0.000000e+00> : vector<8x128xf32>
    %34 = tpu.matmul %31, %33, %cst_32 {dimension_numbers = #tpu.dot_dimension_numbers<[1], [0], [0], [1], [0, 0, 1, 1], [], []>} : vector<8x32xf32>, vector<32x128xf32>, vector<8x128xf32> -> vector<8x128xf32>
    %c1_33 = arith.constant 1 : index
    %c0_34 = arith.constant 0 : index
    %c0_35 = arith.constant 0 : index
    %35 = vector.load %arg6[%c1_33, %c0_34, %c0_35] : memref<2x1x128xf32, #tpu.memory_space<vmem>>, vector<1x1x128xf32>
    %36 = vector.shape_cast %35 : vector<1x1x128xf32> to vector<1x128xf32>
    %37 = vector.broadcast %36 : vector<1x128xf32> to vector<8x128xf32>
    %38 = arith.addf %34, %37 : vector<8x128xf32>
    %c1_36 = arith.constant 1 : index
    %c0_37 = arith.constant 0 : index
    %c0_38 = arith.constant 0 : index
    %39 = vector.load %arg7[%c1_36, %c0_37, %c0_38] : memref<2x8x128xf32, #tpu.memory_space<vmem>>, vector<1x8x128xf32>
    %40 = vector.shape_cast %39 : vector<1x8x128xf32> to vector<8x128xf32>
    %41 = vector.shape_cast %38 : vector<8x128xf32> to vector<1x8x128xf32>
    tpu.vector_store %arg7[%c1_36, %c0_37, %c0_38], %41 {strides = array<i32>} : memref<2x8x128xf32, #tpu.memory_space<vmem>>, vector<1x8x128xf32>,
    return
  }
  func.func @transform_0(%arg0: i32, %arg1: i32) -> (i32, i32, i32) {
    %c0_i32 = arith.constant 0 : i32
    %c0_i32_0 = arith.constant 0 : i32
    return %arg0, %arg1, %c0_i32 : i32, i32, i32
  }
  func.func @transform_1(%arg0: i32, %arg1: i32) -> (i32, i32, i32) {
    %c0_i32 = arith.constant 0 : i32
    %c0_i32_0 = arith.constant 0 : i32
    %c0_i32_1 = arith.constant 0 : i32
    return %arg0, %c0_i32, %c0_i32_0 : i32, i32, i32
  }
  func.func @transform_2(%arg0: i32, %arg1: i32) -> (i32, i32, i32) {
    %c0_i32 = arith.constant 0 : i32
    %c0_i32_0 = arith.constant 0 : i32
    %c0_i32_1 = arith.constant 0 : i32
    return %arg0, %c0_i32, %c0_i32_0 : i32, i32, i32
  }
  func.func @transform_3(%arg0: i32, %arg1: i32) -> (i32, i32, i32) {
    %c0_i32 = arith.constant 0 : i32
    %c0_i32_0 = arith.constant 0 : i32
    %c0_i32_1 = arith.constant 0 : i32
    return %arg0, %c0_i32, %c0_i32_0 : i32, i32, i32
  }
  func.func @transform_4(%arg0: i32, %arg1: i32) -> (i32, i32, i32) {
    %c0_i32 = arith.constant 0 : i32
    %c0_i32_0 = arith.constant 0 : i32
    %c0_i32_1 = arith.constant 0 : i32
    return %arg0, %c0_i32, %c0_i32_0 : i32, i32, i32
  }
  func.func @transform_5(%arg0: i32, %arg1: i32) -> (i32, i32, i32) {
    %c0_i32 = arith.constant 0 : i32
    %c0_i32_0 = arith.constant 0 : i32
    return %arg0, %arg1, %c0_i32 : i32, i32, i32
  }
}

</mosaic_0001>

<llo_original>
// kernel: qnet_forward_stacked.1
$region0: #{qnet_forward_stacked.1}
  #allocation0 [shape = 'u32[]', space=smem, size = 0x4, offset = 0x4, fixed_abs, tag = 'smem constant byte address 0x4 - core index']
  #allocation1 [shape = 'u32[72,128]{1,0:T(1,128)}', space=vmem, size = 0x9000, scoped, tag = 'internal scratch']
  %s0 = inlined_call_operand.vmem [shape: f32[2,8,32], index: 0, kind: input, shape index: {}]
  %s1 = inlined_call_operand.hbm [shape: f32[2,32,32], index: 1, kind: input, shape index: {}]
  %s2 = inlined_call_operand.vmem [shape: f32[2,1,32], index: 2, kind: input, shape index: {}]
  %s3 = inlined_call_operand.hbm [shape: f32[2,32,128], index: 3, kind: input, shape index: {}]
  %s4 = inlined_call_operand.vmem [shape: f32[2,1,128], index: 4, kind: input, shape index: {}]
  %s5 = inlined_call_operand.vmem [shape: f32[2,8,128], index: 5, kind: output, shape index: {}]
  %s6 = sld [smem:[#allocation0]]
  $region38: #{qnet_forward_stacked.1} parent=0
    _
  %s8 = ssub.s32 1, %s6
  %s9 = scalar_select 0, %s8, %s6
  $region1: #{qnet_forward_stacked.1} parent=0
    #allocation2 [shape = 'u8[32768]{0}', space=vmem, size = 0x8000, scoped, tag = 'input window, operand 1, single buffered']
    #allocation3 [shape = 's32[1]{0}', space=sflag, size = 0x4, scoped, tag = 'scoped memory for qnet_forward_stacked.1']
    #allocation4 [shape = 'u8[32768]{0}', space=vmem, size = 0x8000, scoped, tag = 'input window, operand 3, single buffered']
    #allocation5 [shape = 's32[1]{0}', space=sflag, size = 0x4, scoped, tag = 'scoped memory for qnet_forward_stacked.1']
    %10 = vsyncpa [#allocation3], 0
    %11 = vsyncpa [#allocation5], 0
    // Predicated region
    $region2: #{qnet_forward_stacked.1} parent=1 // pred_check
      _
    $region3: #{qnet_forward_stacked.1} parent=1 // pred_check_branch
      %13 = sbr.rel (0) target = $region5
    $region4: #{qnet_forward_stacked.1} parent=1 // pred_region
      _
    $region5: #{qnet_forward_stacked.1} parent=1 // pred_fallthru
      _
    // Predicated region
    $region6: #{qnet_forward_stacked.1} parent=1 // pred_check
      _
    $region7: #{qnet_forward_stacked.1} parent=1 // pred_check_branch
      %15 = sbr.rel (0) target = $region9
    $region8: #{qnet_forward_stacked.1} parent=1 // pred_region
      %17 = vsyncadd [#allocation3], 0
      %s18 = sshll.u32 %s1, 4
      %s19 = int_to_ptr.hbm [resolvable:$true] %s18
      %s20 = sshll.u32 [#allocation2], 4
      %s21 = int_to_ptr.vmem [resolvable:$true] %s20
      %26 = dma.hbm_to_vmem [thread:$0]  %s19, 1024, %s21, [#allocation3], 128, 128, 8
    $region9: #{qnet_forward_stacked.1} parent=1 // pred_fallthru
      _
    // Predicated region
    $region10: #{qnet_forward_stacked.1} parent=1 // pred_check
      _
    $region11: #{qnet_forward_stacked.1} parent=1 // pred_check_branch
      %28 = sbr.rel (0) target = $region13
    $region12: #{qnet_forward_stacked.1} parent=1 // pred_region
      _
    $region13: #{qnet_forward_stacked.1} parent=1 // pred_fallthru
      _
    // Predicated region
    $region14: #{qnet_forward_stacked.1} parent=1 // pred_check
      _
    $region15: #{qnet_forward_stacked.1} parent=1 // pred_check_branch
      %30 = sbr.rel (0) target = $region17
    $region16: #{qnet_forward_stacked.1} parent=1 // pred_region
      %32 = vsyncadd [#allocation5], 0
      %s33 = sshll.u32 %s3, 4
      %s34 = int_to_ptr.hbm [resolvable:$true] %s33
      %s35 = sshll.u32 [#allocation4], 4
      %s36 = int_to_ptr.vmem [resolvable:$true] %s35
      %41 = dma.hbm_to_vmem [thread:$0]  %s34, 1024, %s36, [#allocation5], 128, 128, 8
    $region17: #{qnet_forward_stacked.1} parent=1 // pred_fallthru
      _
    // Predicated region
    $region18: #{qnet_forward_stacked.1} parent=1 // pred_check
      _
    $region19: #{qnet_forward_stacked.1} parent=1 // pred_check_branch
      %43 = sbr.rel (0) target = $region21
    $region20: #{qnet_forward_stacked.1} parent=1 // pred_region
      _
    $region21: #{qnet_forward_stacked.1} parent=1 // pred_fallthru
      _
    // Predicated region
    $region22: #{qnet_forward_stacked.1} parent=1 // pred_check
      _
    $region23: #{qnet_forward_stacked.1} parent=1 // pred_check_branch
      %45 = sbr.rel (0) target = $region25
    $region24: #{qnet_forward_stacked.1} parent=1 // pred_region
      %47 = dma.done [#allocation3], 1024
    $region25: #{qnet_forward_stacked.1} parent=1 // pred_fallthru
      _
    // Predicated region
    $region26: #{qnet_forward_stacked.1} parent=1 // pred_check
      _
    $region27: #{qnet_forward_stacked.1} parent=1 // pred_check_branch
      %49 = sbr.rel (0) target = $region29
    $region28: #{qnet_forward_stacked.1} parent=1 // pred_region
      %51 = dma.done [#allocation5], 1024
    $region29: #{qnet_forward_stacked.1} parent=1 // pred_fallthru
      _
    %v52 = vld [vmem:[%s0] sm:$0xff]
    %v53 = vld [vmem:[#allocation2] sm:$0xff]
    %v54 = vld [vmem:[#allocation2 + $0x8] sm:$0xff]
    %v55 = vld [vmem:[#allocation2 + $0x10] sm:$0xff]
    %v56 = vld [vmem:[#allocation2 + $0x18] sm:$0xff]
    %v57 = vld [vmem:[%s2] sm:$0x1]
    %v59 = vperm.slane %v57, 0
    %vm61 = vcmask 261120
    %v63 = vsel %vm61, %v52, 0
    %65 = vmatpush.msra.mxu0 0.0
    %66 = vmatpush.msra.mxu0 0.0
    %67 = vmatpush.msra.mxu0 0.0
    %68 = vmatpush.msra.mxu0 0.0
    %69 = vmatpush.msra.mxu0 0.0
    %70 = vmatpush.msra.mxu0 0.0
    %71 = vmatpush.msra.mxu0 0.0
    %72 = vmatpush.msra.mxu0 0.0
    %73 = vmatpush.msra.mxu0 0.0
    %74 = vmatpush.msra.mxu0 0.0
    %75 = vmatpush.msra.mxu0 0.0
    %76 = vmatpush.msra.mxu0 0.0
    %77 = vmatpush.msra.mxu0 %v56
    %78 = vmatpush.msra.mxu0 %v55
    %79 = vmatpush.msra.mxu0 %v54
    %80 = vmatpush.msra.mxu0 %v53
    %81 = vmatmul.f32.gmra.mxu0 %v63
    %v82 = vpop.f32.mrf.mxu0
    %v83 = vadd.f32 %v59, %v82
    %84 = vdwg.mxu0
    %v85 = vmax.f32 %v83, 0.0
    %v86 = vld [vmem:[#allocation4] sm:$0xff]
    %v87 = vld [vmem:[#allocation4 + $0x8] sm:$0xff]
    %v88 = vld [vmem:[#allocation4 + $0x10] sm:$0xff]
    %v89 = vld [vmem:[#allocation4 + $0x18] sm:$0xff]
    %v90 = vld [vmem:[%s4] sm:$0x1]
    %v92 = vperm.slane %v90, 0
    %v95 = vsel %vm61, %v85, 0
    %97 = vmatpush.msra.mxu0 0.0
    %98 = vmatpush.msra.mxu0 0.0
    %99 = vmatpush.msra.mxu0 0.0
    %100 = vmatpush.msra.mxu0 0.0
    %101 = vmatpush.msra.mxu0 0.0
    %102 = vmatpush.msra.mxu0 0.0
    %103 = vmatpush.msra.mxu0 0.0
    %104 = vmatpush.msra.mxu0 0.0
    %105 = vmatpush.msra.mxu0 0.0
    %106 = vmatpush.msra.mxu0 0.0
    %107 = vmatpush.msra.mxu0 0.0
    %108 = vmatpush.msra.mxu0 0.0
    %109 = vmatpush.msra.mxu0 %v89
    %110 = vmatpush.msra.mxu0 %v88
    %111 = vmatpush.msra.mxu0 %v87
    %112 = vmatpush.msra.mxu0 %v86
    %113 = vmatmul.f32.gmra.mxu0 %v95
    %v114 = vpop.f32.mrf.mxu0
    %v115 = vadd.f32 %v92, %v114
    %116 = vdwg.mxu0
    %117 = vst [vmem:[%s5] sm:$0xff] %v115
    %s118 = scalar_lea.vmem %s0, 8
    %v119 = vld [vmem:[%s118] sm:$0xff]
    %s120 = scalar_lea.vmem [#allocation2], 32
    %v121 = vld [vmem:[%s120] sm:$0xff]
    %v122 = vld [vmem:[%s120 + $0x8] sm:$0xff]
    %v123 = vld [vmem:[%s120 + $0x10] sm:$0xff]
    %v124 = vld [vmem:[%s120 + $0x18] sm:$0xff]
    %s125 = scalar_lea.vmem %s2, 1
    %v126 = vld [vmem:[%s125] sm:$0x1]
    %v128 = vperm.slane %v126, 0
    %v131 = vsel %vm61, %v119, 0
    %133 = vmatpush.msra.mxu0 0.0
    %134 = vmatpush.msra.mxu0 0.0
    %135 = vmatpush.msra.mxu0 0.0
    %136 = vmatpush.msra.mxu0 0.0
    %137 = vmatpush.msra.mxu0 0.0
    %138 = vmatpush.msra.mxu0 0.0
    %139 = vmatpush.msra.mxu0 0.0
    %140 = vmatpush.msra.mxu0 0.0
    %141 = vmatpush.msra.mxu0 0.0
    %142 = vmatpush.msra.mxu0 0.0
    %143 = vmatpush.msra.mxu0 0.0
    %144 = vmatpush.msra.mxu0 0.0
    %145 = vmatpush.msra.mxu0 %v124
    %146 = vmatpush.msra.mxu0 %v123
    %147 = vmatpush.msra.mxu0 %v122
    %148 = vmatpush.msra.mxu0 %v121
    %149 = vmatmul.f32.gmra.mxu0 %v131
    %v150 = vpop.f32.mrf.mxu0
    %v151 = vadd.f32 %v128, %v150
    %152 = vdwg.mxu0
    %v153 = vmax.f32 %v151, 0.0
    %s154 = scalar_lea.vmem [#allocation4], 32
    %v155 = vld [vmem:[%s154] sm:$0xff]
    %v156 = vld [vmem:[%s154 + $0x8] sm:$0xff]
    %v157 = vld [vmem:[%s154 + $0x10] sm:$0xff]
    %v158 = vld [vmem:[%s154 + $0x18] sm:$0xff]
    %s159 = scalar_lea.vmem %s4, 1
    %v160 = vld [vmem:[%s159] sm:$0x1]
    %v162 = vperm.slane %v160, 0
    %v165 = vsel %vm61, %v153, 0
    %167 = vmatpush.msra.mxu0 0.0
    %168 = vmatpush.msra.mxu0 0.0
    %169 = vmatpush.msra.mxu0 0.0
    %170 = vmatpush.msra.mxu0 0.0
    %171 = vmatpush.msra.mxu0 0.0
    %172 = vmatpush.msra.mxu0 0.0
    %173 = vmatpush.msra.mxu0 0.0
    %174 = vmatpush.msra.mxu0 0.0
    %175 = vmatpush.msra.mxu0 0.0
    %176 = vmatpush.msra.mxu0 0.0
    %177 = vmatpush.msra.mxu0 0.0
    %178 = vmatpush.msra.mxu0 0.0
    %179 = vmatpush.msra.mxu0 %v158
    %180 = vmatpush.msra.mxu0 %v157
    %181 = vmatpush.msra.mxu0 %v156
    %182 = vmatpush.msra.mxu0 %v155
    %183 = vmatmul.f32.gmra.mxu0 %v165
    %v184 = vpop.f32.mrf.mxu0
    %v185 = vadd.f32 %v162, %v184
    %186 = vdwg.mxu0
    %s187 = scalar_lea.vmem %s5, 8
    %188 = vst [vmem:[%s187] sm:$0xff] %v185
    // Predicated region
    $region30: #{qnet_forward_stacked.1} parent=1 // pred_check
      _
    $region31: #{qnet_forward_stacked.1} parent=1 // pred_check_branch
      %190 = sbr.rel (0) target = $region33
    $region32: #{qnet_forward_stacked.1} parent=1 // pred_region
      _
    $region33: #{qnet_forward_stacked.1} parent=1 // pred_fallthru
      _
    // Predicated region
    $region34: #{qnet_forward_stacked.1} parent=1 // pred_check
      _
    $region35: #{qnet_forward_stacked.1} parent=1 // pred_check_branch
      %192 = sbr.rel (0) target = $region37
    $region36: #{qnet_forward_stacked.1} parent=1 // pred_region
      _
    $region37: #{qnet_forward_stacked.1} parent=1 // pred_fallthru
      _
    %193 = vsyncpa [#allocation3], 1
    %194 = vsyncpa [#allocation5], 1

</llo_original>
